<compile_context>
chip_gen: v5e
topology: v5e:2x2
jax: 0.10.0
libtpu: 0.0.40
codegen_flags: <defaults>
</compile_context>

<pallas_src>
import functools

import jax
import jax.numpy as jnp
from jax.experimental import pallas as pl
from jax.experimental.pallas import tpu as pltpu

_LANE = 128


def _fused_mlp_kernel(x_ref, *refs, num_layers, activations, mxu_dtype):
    """Fused MLP in transposed (features-on-sublanes, batch-on-lanes) layout.

    refs = (w_0..w_{L-1}, b_0..b_{L-1}, o_ref)
      x_ref : (D0, tb)      input tile (batch on the lane axis)
      w_k   : (Dout, Din)   PyTorch nn.Linear.weight layout, VMEM-resident
      b_k   : (Dout, 1)     broadcasts across lanes (batch)
      o_ref : (d_last, tb)  lane-dense head output
    """
    o_ref = refs[-1]
    w_refs = refs[:num_layers]
    b_refs = refs[num_layers:2 * num_layers]

    h = x_ref[...]                                        # (Din, tb)
    for k in range(num_layers):
        w = w_refs[k][...]                                # pre-cast in wrapper
        b = b_refs[k][...].astype(jnp.float32)            # (Dout, 1)
        # MXU matmul (optionally bf16 operands), f32 accumulation, f32 epilogue.
        y = jnp.dot(w, h.astype(mxu_dtype),
                    preferred_element_type=jnp.float32)
        y = y + b
        act = activations[k]
        if act == "relu":
            y = jnp.maximum(y, 0.0)
        elif act == "tanh":
            y = jnp.tanh(y)                               # EUP
        elif act == "sigmoid":
            # Exact sigmoid: the head is only (1, tb) so this is cheap, and
            # exp(-y) -> +inf already gives the correct saturated 0 (no clip).
            y = 1.0 / (1.0 + jnp.exp(-y))
        elif act == "none":
            pass
        else:
            raise ValueError(f"unknown activation: {act}")
        h = y
    o_ref[...] = h.astype(o_ref.dtype)


def _choose_batch_tile(B, batch_tile):
    """Largest multiple-of-128 tile <= batch_tile dividing B, preferring >= 2
    grid steps (so the parallel batch axis can use both v7x TensorCores).
    Falls back to the whole batch when B is not a multiple of 128."""
    if B <= _LANE or B % _LANE != 0:
        return B
    tb = min(batch_tile, B)
    tb -= tb % _LANE
    while tb > _LANE and B % tb != 0:
        tb -= _LANE
    if tb < _LANE or B % tb != 0:
        return B
    if B // tb < 2:
        half = (tb // 2) - ((tb // 2) % _LANE)
        if half >= _LANE and B % half == 0:
            tb = half
    return tb


def feedforward_flexible(x, params, activations, *, batch_tile=1024, mxu_dtype=None):
    """Forward pass of FeedforwardFlexible as a single fused Pallas kernel.

    x: (B, D0).  params: list of (w, b) with w in PyTorch nn.Linear layout
    (Dout, Din) and b of shape (Dout,).  The last entry is the Linear(., 1)
    head; the trailing Sigmoid is fused into the kernel.  activations[k] in
    {"relu", "tanh", "sigmoid", "none"} stands in for the activation module
    following hidden Linear k.  Returns (B, 1) like the PyTorch module.
    """
    B, D0 = x.shape
    L = len(params)
    assert len(activations) == L - 1

    ws = [w for (w, _) in params]
    bs = [b.reshape(-1, 1) for (_, b) in params]
    widths = [D0] + [w.shape[0] for w in ws]
    assert all(w.shape == (widths[k + 1], widths[k]) for k, w in enumerate(ws))
    d_last = widths[-1]

    if mxu_dtype is None:
        # bf16 operands roughly 2-4x MXU throughput once layers are wide enough
        # to be compute-visible; keep f32 for narrow (toy) nets for exactness.
        mxu_dtype = jnp.bfloat16 if max(widths) >= 128 else x.dtype
    # Pre-cast in the wrapper: halves weight DMA bytes / resident VMEM (bf16)
    # and removes per-grid-step casts of every weight element in the kernel.
    ws = [w.astype(mxu_dtype) for w in ws]
    bs = [b.astype(jnp.float32) for b in bs]

    # Transposed layout: features on sublanes, batch on lanes (wrapper-side
    # layout plumbing).  Head output is a lane-dense (d_last, B) slab.
    xt = x.T                                              # (D0, B)

    tb = _choose_batch_tile(B, batch_tile)
    assert B % tb == 0, (B, tb)
    grid = (B // tb,)

    full_acts = tuple(activations) + ("sigmoid",)
    kernel = functools.partial(_fused_mlp_kernel, num_layers=L,
                               activations=full_acts, mxu_dtype=mxu_dtype)

    in_specs = [pl.BlockSpec((D0, tb), lambda i: (0, i))]
    # Weights/biases: full-array VMEM-resident blocks (constant index map).
    # TODO(synk): for v7x-scale widths (weights approaching ~16-32 MiB), single-
    # buffer these specs / tile the contraction instead of keeping all resident.
    in_specs += [pl.BlockSpec(w.shape, lambda i: (0, 0)) for w in ws]
    in_specs += [pl.BlockSpec(b.shape, lambda i: (0, 0)) for b in bs]
    out_specs = pl.BlockSpec((d_last, tb), lambda i: (0, i))

    # Rough VMEM budget: double-buffered I/O tiles + resident params + live
    # activations; only raise the scoped-VMEM limit when actually needed.
    itemsize = jnp.dtype(x.dtype).itemsize
    vmem_est = 2 * (D0 + d_last) * tb * itemsize
    vmem_est += sum(2 * w.size * jnp.dtype(w.dtype).itemsize for w in ws)
    vmem_est += sum(2 * b.size * 4 for b in bs)
    vmem_est += 3 * max(widths) * tb * 4
    cp_kwargs = dict(dimension_semantics=("parallel",))   # batch axis -> 2 TCs on v7x
    if vmem_est > 12 * 1024 * 1024:
        cp_kwargs["vmem_limit_bytes"] = min(2 * vmem_est, 64 * 1024 * 1024)

    out = pl.pallas_call(
        kernel,
        out_shape=jax.ShapeDtypeStruct((d_last, B), x.dtype),
        grid=grid,
        in_specs=in_specs,
        out_specs=out_specs,
        compiler_params=pltpu.CompilerParams(**cp_kwargs),
    )(xt, *ws, *bs)
    return out.T                                          # (B, 1)


def init_params(key, h_sizes):
    """Deterministic PyTorch-style (uniform +-1/sqrt(fan_in)) init.

    Mirrors FeedforwardFlexible.__init__: Linear(h[k], h[k+1]) for each k,
    then Linear(h[-1], 1).  Weights use nn.Linear layout (Dout, Din)."""
    dims = list(zip(h_sizes[:-1], h_sizes[1:])) + [(h_sizes[-1], 1)]
    params = []
    for (din, dout) in dims:
        key, kw, kb = jax.random.split(key, 3)
        bound = 1.0 / jnp.sqrt(jnp.float32(din))
        w = jax.random.uniform(kw, (dout, din), jnp.float32, -bound, bound)
        b = jax.random.uniform(kb, (dout,), jnp.float32, -bound, bound)
        params.append((w, b))
    return params


def feedforward_reference(x, params, activations):
    """Pure-JAX reference for correctness checking."""
    act_fns = {"relu": lambda v: jnp.maximum(v, 0.0),
               "tanh": jnp.tanh,
               "sigmoid": jax.nn.sigmoid,
               "none": lambda v: v}
    for k in range(len(params) - 1):
        w, b = params[k]
        x = act_fns[activations[k]](x @ w.T + b)
    w, b = params[-1]
    return jax.nn.sigmoid(x @ w.T + b)


if __name__ == "__main__":
    # Small shapes consistent with the module: h_sizes=[32, 64, 32], batch=256
    # (enough rows to exercise >= 2 lane-dense grid steps with tb=128).
    h_sizes = [32, 64, 32]
    activations = ["relu", "tanh"]   # stand-ins for the activation modules
    batch = 256

    key = jax.random.PRNGKey(0)
    key, kx = jax.random.split(key)
    x = jax.random.normal(kx, (batch, h_sizes[0]), jnp.float32)
    params = init_params(key, h_sizes)

    out = feedforward_flexible(x, params, activations)
    out = jax.block_until_ready(out)
    ref = feedforward_reference(x, params, activations)

    assert out.shape == (batch, 1), out.shape
    max_err = float(jnp.max(jnp.abs(out - ref)))
    assert jnp.allclose(out, ref, atol=1e-5, rtol=1e-5), max_err

    print("KERNEL_OK")
</pallas_src>

<mosaic_0001>
module attributes {stable_mosaic.version = 11 : i64} {
  func.func @_fused_mlp_kernel(%arg0: i32, %arg1: memref<32x128xf32, #tpu.memory_space<vmem>>, %arg2: memref<64x32xf32, #tpu.memory_space<vmem>>, %arg3: memref<32x64xf32, #tpu.memory_space<vmem>>, %arg4: memref<1x32xf32, #tpu.memory_space<vmem>>, %arg5: memref<64x1xf32, #tpu.memory_space<vmem>>, %arg6: memref<32x1xf32, #tpu.memory_space<vmem>>, %arg7: memref<1x1xf32, #tpu.memory_space<vmem>>, %arg8: memref<1x128xf32, #tpu.memory_space<vmem>>) attributes {dimension_semantics = [#tpu.dimension_semantics<parallel>], iteration_bounds = array<i64: 2>, scalar_prefetch = 0 : i64, scratch_operands = 0 : i64, tpu.core_type = #tpu.core_type<tc>, window_params = [{transform_indices = @transform_0, window_bounds = array<i64: 32, 128>}, {pipeline_mode = #tpu.pipeline_mode<synchronous>, transform_indices = @transform_1, window_bounds = array<i64: 64, 32>}, {pipeline_mode = #tpu.pipeline_mode<synchronous>, transform_indices = @transform_2, window_bounds = array<i64: 32, 64>}, {pipeline_mode = #tpu.pipeline_mode<synchronous>, transform_indices = @transform_3, window_bounds = array<i64: 1, 32>}, {pipeline_mode = #tpu.pipeline_mode<synchronous>, transform_indices = @transform_4, window_bounds = array<i64: 64, 1>}, {pipeline_mode = #tpu.pipeline_mode<synchronous>, transform_indices = @transform_5, window_bounds = array<i64: 32, 1>}, {pipeline_mode = #tpu.pipeline_mode<synchronous>, transform_indices = @transform_6, window_bounds = array<i64: 1, 1>}, {transform_indices = @transform_7, window_bounds = array<i64: 1, 128>}]} {
    %c0 = arith.constant 0 : index
    %c0_0 = arith.constant 0 : index
    %0 = vector.load %arg1[%c0, %c0_0] : memref<32x128xf32, #tpu.memory_space<vmem>>, vector<32x128xf32>
    %c0_1 = arith.constant 0 : index
    %c0_2 = arith.constant 0 : index
    %1 = vector.load %arg2[%c0_1, %c0_2] : memref<64x32xf32, #tpu.memory_space<vmem>>, vector<64x32xf32>
    %c0_3 = arith.constant 0 : index
    %c0_4 = arith.constant 0 : index
    %2 = vector.load %arg5[%c0_3, %c0_4] : memref<64x1xf32, #tpu.memory_space<vmem>>, vector<64x1xf32>
    %cst = arith.constant dense<0.000000e+00> : vector<64x128xf32>
    %3 = tpu.matmul %1, %0, %cst {dimension_numbers = #tpu.dot_dimension_numbers<[1], [0], [0], [1], [0, 0, 1, 1], [], []>} : vector<64x32xf32>, vector<32x128xf32>, vector<64x128xf32> -> vector<64x128xf32>
    %4 = vector.broadcast %2 : vector<64x1xf32> to vector<64x128xf32>
    %5 = arith.addf %3, %4 : vector<64x128xf32>
    %cst_5 = arith.constant 0.000000e+00 : f32
    %6 = vector.broadcast %cst_5 : f32 to vector<64x128xf32>
    %7 = arith.maximumf %5, %6 : vector<64x128xf32>
    %c0_6 = arith.constant 0 : index
    %c0_7 = arith.constant 0 : index
    %8 = vector.load %arg3[%c0_6, %c0_7] : memref<32x64xf32, #tpu.memory_space<vmem>>, vector<32x64xf32>
    %c0_8 = arith.constant 0 : index
    %c0_9 = arith.constant 0 : index
    %9 = vector.load %arg6[%c0_8, %c0_9] : memref<32x1xf32, #tpu.memory_space<vmem>>, vector<32x1xf32>
    %cst_10 = arith.constant dense<0.000000e+00> : vector<32x128xf32>
    %10 = tpu.matmul %8, %7, %cst_10 {dimension_numbers = #tpu.dot_dimension_numbers<[1], [0], [0], [1], [0, 0, 1, 1], [], []>} : vector<32x64xf32>, vector<64x128xf32>, vector<32x128xf32> -> vector<32x128xf32>
    %11 = vector.broadcast %9 : vector<32x1xf32> to vector<32x128xf32>
    %12 = arith.addf %10, %11 : vector<32x128xf32>
    %13 = math.tanh %12 : vector<32x128xf32>
    %c0_11 = arith.constant 0 : index
    %c0_12 = arith.constant 0 : index
    %14 = vector.load %arg4[%c0_11, %c0_12] : memref<1x32xf32, #tpu.memory_space<vmem>>, vector<1x32xf32>
    %c0_13 = arith.constant 0 : index
    %c0_14 = arith.constant 0 : index
    %15 = vector.load %arg7[%c0_13, %c0_14] : memref<1x1xf32, #tpu.memory_space<vmem>>, vector<1x1xf32>
    %cst_15 = arith.constant dense<0.000000e+00> : vector<1x128xf32>
    %16 = tpu.matmul %14, %13, %cst_15 {dimension_numbers = #tpu.dot_dimension_numbers<[1], [0], [0], [1], [0, 0, 1, 1], [], []>} : vector<1x32xf32>, vector<32x128xf32>, vector<1x128xf32> -> vector<1x128xf32>
    %17 = vector.broadcast %15 : vector<1x1xf32> to vector<1x128xf32>
    %18 = arith.addf %16, %17 : vector<1x128xf32>
    %cst_16 = arith.constant 0.000000e+00 : f32
    %19 = vector.broadcast %cst_16 : f32 to vector<1x128xf32>
    %20 = arith.subf %19, %18 : vector<1x128xf32>
    %21 = math.exp %20 : vector<1x128xf32>
    %cst_17 = arith.constant 1.000000e+00 : f32
    %22 = vector.broadcast %cst_17 : f32 to vector<1x128xf32>
    %23 = arith.addf %22, %21 : vector<1x128xf32>
    %cst_18 = arith.constant 1.000000e+00 : f32
    %24 = vector.broadcast %cst_18 : f32 to vector<1x128xf32>
    %25 = arith.divf %24, %23 : vector<1x128xf32>
    %c0_19 = arith.constant 0 : index
    %c0_20 = arith.constant 0 : index
    %26 = vector.load %arg8[%c0_19, %c0_20] : memref<1x128xf32, #tpu.memory_space<vmem>>, vector<1x128xf32>
    tpu.vector_store %arg8[%c0_19, %c0_20], %25 {strides = array<i32>} : memref<1x128xf32, #tpu.memory_space<vmem>>, vector<1x128xf32>,
    return
  }
  func.func @transform_0(%arg0: i32) -> (i32, i32) {
    %c0_i32 = arith.constant 0 : i32
    %c0_i32_0 = arith.constant 0 : i32
    return %c0_i32, %arg0 : i32, i32
  }
  func.func @transform_1(%arg0: i32) -> (i32, i32) {
    %c0_i32 = arith.constant 0 : i32
    %c0_i32_0 = arith.constant 0 : i32
    %c0_i32_1 = arith.constant 0 : i32
    return %c0_i32, %c0_i32_0 : i32, i32
  }
  func.func @transform_2(%arg0: i32) -> (i32, i32) {
    %c0_i32 = arith.constant 0 : i32
    %c0_i32_0 = arith.constant 0 : i32
    %c0_i32_1 = arith.constant 0 : i32
    return %c0_i32, %c0_i32_0 : i32, i32
  }
  func.func @transform_3(%arg0: i32) -> (i32, i32) {
    %c0_i32 = arith.constant 0 : i32
    %c0_i32_0 = arith.constant 0 : i32
    %c0_i32_1 = arith.constant 0 : i32
    return %c0_i32, %c0_i32_0 : i32, i32
  }
  func.func @transform_4(%arg0: i32) -> (i32, i32) {
    %c0_i32 = arith.constant 0 : i32
    %c0_i32_0 = arith.constant 0 : i32
    %c0_i32_1 = arith.constant 0 : i32
    return %c0_i32, %c0_i32_0 : i32, i32
  }
  func.func @transform_5(%arg0: i32) -> (i32, i32) {
    %c0_i32 = arith.constant 0 : i32
    %c0_i32_0 = arith.constant 0 : i32
    %c0_i32_1 = arith.constant 0 : i32
    return %c0_i32, %c0_i32_0 : i32, i32
  }
  func.func @transform_6(%arg0: i32) -> (i32, i32) {
    %c0_i32 = arith.constant 0 : i32
    %c0_i32_0 = arith.constant 0 : i32
    %c0_i32_1 = arith.constant 0 : i32
    return %c0_i32, %c0_i32_0 : i32, i32
  }
  func.func @transform_7(%arg0: i32) -> (i32, i32) {
    %c0_i32 = arith.constant 0 : i32
    %c0_i32_0 = arith.constant 0 : i32
    return %c0_i32, %arg0 : i32, i32
  }
}

</mosaic_0001>

<llo_original>
// kernel: tpu_custom_call.1
$region0: #{tpu_custom_call.1}
  #allocation0 [shape = 'u32[]', space=smem, size = 0x4, offset = 0x4, fixed_abs, tag = 'smem constant byte address 0x4 - core index']
  #allocation1 [shape = 'u32[72,128]{1,0:T(1,128)}', space=vmem, size = 0x9000, scoped, tag = 'internal scratch']
  #allocation2 [shape = 'f32[1,1]{1,0:T(1,128)S(1)}', space=vmem, size = 0x200, scoped, tag = 'scoped memory for tpu_custom_call.1']
  %s0 = inlined_call_operand.vmem [shape: f32[32,256], index: 0, kind: input, shape index: {}]
  %s1 = inlined_call_operand.vmem [shape: f32[64,32], index: 1, kind: input, shape index: {}]
  %s2 = inlined_call_operand.vmem [shape: f32[32,64], index: 2, kind: input, shape index: {}]
  %s3 = inlined_call_operand.vmem [shape: f32[1,32], index: 3, kind: input, shape index: {}]
  %s4 = inlined_call_operand.vmem [shape: f32[64,1], index: 4, kind: input, shape index: {}]
  %s5 = inlined_call_operand.vmem [shape: f32[32,1], index: 5, kind: input, shape index: {}]
  %s6 = inlined_call_operand.<no memory space> [shape: f32[1,1], index: 6, kind: input, shape index: {}]
  %s7 = inlined_call_operand.hbm [shape: f32[1,256], index: 7, kind: output, shape index: {}]
  %s8 = sld [smem:[#allocation0]]
  $region99: #{tpu_custom_call.1} parent=0
    _
  %s10 = ssub.s32 1, %s8
  %s11 = scalar_select 0, %s10, %s8
  %v12 = vstv %s6
  %13 = vst [vmem:[#allocation2] sm:$0x1] %v12
  $region1: #{tpu_custom_call.1} parent=0
    #allocation3 [shape = 'u8[32768]{0}', space=vmem, size = 0x8000, scoped, tag = 'input window, operand 0']
    #allocation4 [shape = 'u8[1024]{0}', space=vmem, size = 0x400, scoped, tag = 'output window, operand 0']
    #allocation5 [shape = 's32[2]{0}', space=sflag, size = 0x8, scoped, tag = 'scoped memory for tpu_custom_call.1']
    %14 = vsyncpa [#allocation5], 0
    %s15 = scalar_lea.sflag [#allocation5], 1
    %16 = vsyncpa %s15, 0
    loop: start=0, step=1, limit=4
    $region2: #{tpu_custom_call.1} parent=1 // loop_pre_header
      _
    $region3: #{tpu_custom_call.1} parent=1 // loop_header
      %s18 = sphi 0, %s22
      %p19 = scmp.ge.s32.totalorder %s18, 4
      %s28 = sphi 0, %s30
      %s31 = sphi 0, %s28
      %s32 = sphi 0, %s31
      %s48 = sphi 0, %s32
      %s52 = sphi 0, %s52
      %s54 = sphi 0, %s52
      %s55 = sphi 0, %s54
      %s69 = sphi 0, %s55
      %s73 = sphi 0, %s73
      %s75 = sphi 0, %s73
      %s76 = sphi 0, %s75
      %s90 = sphi 0, %s76
      %s94 = sphi 0, %s94
      %s96 = sphi 0, %s94
      %s97 = sphi 0, %s96
      %s111 = sphi 0, %s97
      %s115 = sphi 0, %s115
      %s117 = sphi 0, %s115
      %s118 = sphi 0, %s117
      %s132 = sphi 0, %s118
      %s136 = sphi 0, %s136
      %s138 = sphi 0, %s136
      %s139 = sphi 0, %s138
      %s153 = sphi 0, %s139
      %s157 = sphi 0, %s157
      %s159 = sphi 0, %s157
      %s160 = sphi 0, %s159
      %s174 = sphi 0, %s160
      %s180 = sphi 0, %s182
      %s183 = sphi 0, %s180
      %s184 = sphi 0, %s183
      %s200 = sphi 0, %s184
    $region4: #{tpu_custom_call.1} parent=1 // loop_header_branch
      %21 = sbr.rel (%p19) target = $region8
    $region5: #{tpu_custom_call.1} parent=1 // loop_body
      %s23 = ssub.s32 %s18, 1
      %s24 = ssub.s32 %s18, 2
      %s25 = sadd.s32 %s18, 1
      %s26 = ssub.s32 %s18, %s25
      %p27 = scmp.eq.s32.totalorder %s26, 0
      %s29 = sadd.s32 %s28, 1
      %s30 = scalar_select %p27, %s28, %s29
      %p33 = pneg %p27
      %p34 = scmp.eq.s32.totalorder %s18, 1
      %p35 = por %p33, %p34
      %p36 = scmp.ne.s32.totalorder %s28, %s31
      %p37 = scmp.eq.s32.totalorder %s18, 0
      %p38 = por %p36, %p37
      %p39 = scmp.ne.s32.totalorder %s28, %s31
      %p40 = scmp.eq.s32.totalorder %s23, 1
      %p41 = por %p39, %p40
      %p42 = scmp.ne.s32.totalorder %s31, %s32
      %p43 = scmp.eq.s32.totalorder %s23, 0
      %p44 = por %p42, %p43
      %p45 = scmp.ne.s32.totalorder %s31, %s32
      %p46 = scmp.eq.s32.totalorder %s24, 1
      %p47 = por %p45, %p46
      %p49 = scmp.ne.s32.totalorder %s32, %s48
      %p50 = scmp.eq.s32.totalorder %s24, 0
      %p51 = por %p49, %p50
      %s53 = sadd.s32 %s52, 1
      %p56 = scmp.eq.s32.totalorder %s18, 1
      %p57 = scmp.ne.s32.totalorder %s52, %s54
      %p58 = scmp.eq.s32.totalorder %s18, 0
      %p59 = por %p57, %p58
      %p60 = scmp.ne.s32.totalorder %s52, %s54
      %p61 = scmp.eq.s32.totalorder %s23, 1
      %p62 = por %p60, %p61
      %p63 = scmp.ne.s32.totalorder %s54, %s55
      %p64 = scmp.eq.s32.totalorder %s23, 0
      %p65 = por %p63, %p64
      %p66 = scmp.ne.s32.totalorder %s54, %s55
      %p67 = scmp.eq.s32.totalorder %s24, 1
      %p68 = por %p66, %p67
      %p70 = scmp.ne.s32.totalorder %s55, %s69
      %p71 = scmp.eq.s32.totalorder %s24, 0
      %p72 = por %p70, %p71
      %s74 = sadd.s32 %s73, 1
      %p77 = scmp.eq.s32.totalorder %s18, 1
      %p78 = scmp.ne.s32.totalorder %s73, %s75
      %p79 = scmp.eq.s32.totalorder %s18, 0
      %p80 = por %p78, %p79
      %p81 = scmp.ne.s32.totalorder %s73, %s75
      %p82 = scmp.eq.s32.totalorder %s23, 1
      %p83 = por %p81, %p82
      %p84 = scmp.ne.s32.totalorder %s75, %s76
      %p85 = scmp.eq.s32.totalorder %s23, 0
      %p86 = por %p84, %p85
      %p87 = scmp.ne.s32.totalorder %s75, %s76
      %p88 = scmp.eq.s32.totalorder %s24, 1
      %p89 = por %p87, %p88
      %p91 = scmp.ne.s32.totalorder %s76, %s90
      %p92 = scmp.eq.s32.totalorder %s24, 0
      %p93 = por %p91, %p92
      %s95 = sadd.s32 %s94, 1
      %p98 = scmp.eq.s32.totalorder %s18, 1
      %p99 = scmp.ne.s32.totalorder %s94, %s96
      %p100 = scmp.eq.s32.totalorder %s18, 0
      %p101 = por %p99, %p100
      %p102 = scmp.ne.s32.totalorder %s94, %s96
      %p103 = scmp.eq.s32.totalorder %s23, 1
      %p104 = por %p102, %p103
      %p105 = scmp.ne.s32.totalorder %s96, %s97
      %p106 = scmp.eq.s32.totalorder %s23, 0
      %p107 = por %p105, %p106
      %p108 = scmp.ne.s32.totalorder %s96, %s97
      %p109 = scmp.eq.s32.totalorder %s24, 1
      %p110 = por %p108, %p109
      %p112 = scmp.ne.s32.totalorder %s97, %s111
      %p113 = scmp.eq.s32.totalorder %s24, 0
      %p114 = por %p112, %p113
      %s116 = sadd.s32 %s115, 1
      %p119 = scmp.eq.s32.totalorder %s18, 1
      %p120 = scmp.ne.s32.totalorder %s115, %s117
      %p121 = scmp.eq.s32.totalorder %s18, 0
      %p122 = por %p120, %p121
      %p123 = scmp.ne.s32.totalorder %s115, %s117
      %p124 = scmp.eq.s32.totalorder %s23, 1
      %p125 = por %p123, %p124
      %p126 = scmp.ne.s32.totalorder %s117, %s118
      %p127 = scmp.eq.s32.totalorder %s23, 0
      %p128 = por %p126, %p127
      %p129 = scmp.ne.s32.totalorder %s117, %s118
      %p130 = scmp.eq.s32.totalorder %s24, 1
      %p131 = por %p129, %p130
      %p133 = scmp.ne.s32.totalorder %s118, %s132
      %p134 = scmp.eq.s32.totalorder %s24, 0
      %p135 = por %p133, %p134
      %s137 = sadd.s32 %s136, 1
      %p140 = scmp.eq.s32.totalorder %s18, 1
      %p141 = scmp.ne.s32.totalorder %s136, %s138
      %p142 = scmp.eq.s32.totalorder %s18, 0
      %p143 = por %p141, %p142
      %p144 = scmp.ne.s32.totalorder %s136, %s138
      %p145 = scmp.eq.s32.totalorder %s23, 1
      %p146 = por %p144, %p145
      %p147 = scmp.ne.s32.totalorder %s138, %s139
      %p148 = scmp.eq.s32.totalorder %s23, 0
      %p149 = por %p147, %p148
      %p150 = scmp.ne.s32.totalorder %s138, %s139
      %p151 = scmp.eq.s32.totalorder %s24, 1
      %p152 = por %p150, %p151
      %p154 = scmp.ne.s32.totalorder %s139, %s153
      %p155 = scmp.eq.s32.totalorder %s24, 0
      %p156 = por %p154, %p155
      %s158 = sadd.s32 %s157, 1
      %p161 = scmp.eq.s32.totalorder %s18, 1
      %p162 = scmp.ne.s32.totalorder %s157, %s159
      %p163 = scmp.eq.s32.totalorder %s18, 0
      %p164 = por %p162, %p163
      %p165 = scmp.ne.s32.totalorder %s157, %s159
      %p166 = scmp.eq.s32.totalorder %s23, 1
      %p167 = por %p165, %p166
      %p168 = scmp.ne.s32.totalorder %s159, %s160
      %p169 = scmp.eq.s32.totalorder %s23, 0
      %p170 = por %p168, %p169
      %p171 = scmp.ne.s32.totalorder %s159, %s160
      %p172 = scmp.eq.s32.totalorder %s24, 1
      %p173 = por %p171, %p172
      %p175 = scmp.ne.s32.totalorder %s160, %s174
      %p176 = scmp.eq.s32.totalorder %s24, 0
      %p177 = por %p175, %p176
      %s178 = ssub.s32 %s18, %s25
      %p179 = scmp.eq.s32.totalorder %s178, 0
      %s181 = sadd.s32 %s180, 1
      %s182 = scalar_select %p179, %s180, %s181
      %p185 = pneg %p179
      %p186 = scmp.eq.s32.totalorder %s18, 1
      %p187 = por %p185, %p186
      %p188 = scmp.ne.s32.totalorder %s180, %s183
      %p189 = scmp.eq.s32.totalorder %s18, 0
      %p190 = por %p188, %p189
      %p191 = scmp.ne.s32.totalorder %s180, %s183
      %p192 = scmp.eq.s32.totalorder %s23, 1
      %p193 = por %p191, %p192
      %p194 = scmp.ne.s32.totalorder %s183, %s184
      %p195 = scmp.eq.s32.totalorder %s23, 0
      %p196 = por %p194, %p195
      %p197 = scmp.ne.s32.totalorder %s183, %s184
      %p198 = scmp.eq.s32.totalorder %s24, 1
      %p199 = por %p197, %p198
      %p201 = scmp.ne.s32.totalorder %s184, %s200
      %p202 = scmp.eq.s32.totalorder %s24, 0
      %p203 = por %p201, %p202
      %p204 = scmp.le.s32.totalorder 1, %s18
      %p205 = scmp.lt.s32.totalorder %s18, 3
      %p206 = pnand %p204, %p205
      %p207 = pneg %p206
      // Predicated region
      $region9: #{tpu_custom_call.1} parent=5 // pred_check
        _
      $region10: #{tpu_custom_call.1} parent=5 // pred_check_branch
        %209 = sbr.rel (%p206) target = $region12
      $region11: #{tpu_custom_call.1} parent=5 // pred_region
        %s210 = ssub.s32 %s18, 1
        // Predicated region
        $region13: #{tpu_custom_call.1} parent=11 // pred_check
          %p211 = pneg %p65
        $region14: #{tpu_custom_call.1} parent=11 // pred_check_branch
          %213 = sbr.rel (%p211) target = $region16
        $region15: #{tpu_custom_call.1} parent=11 // pred_region
          _
        $region16: #{tpu_custom_call.1} parent=11 // pred_fallthru
          _
        // Predicated region
        $region17: #{tpu_custom_call.1} parent=11 // pred_check
          %p214 = pneg %p86
        $region18: #{tpu_custom_call.1} parent=11 // pred_check_branch
          %216 = sbr.rel (%p214) target = $region20
        $region19: #{tpu_custom_call.1} parent=11 // pred_region
          _
        $region20: #{tpu_custom_call.1} parent=11 // pred_fallthru
          _
        // Predicated region
        $region21: #{tpu_custom_call.1} parent=11 // pred_check
          %p217 = pneg %p107
        $region22: #{tpu_custom_call.1} parent=11 // pred_check_branch
          %219 = sbr.rel (%p217) target = $region24
        $region23: #{tpu_custom_call.1} parent=11 // pred_region
          _
        $region24: #{tpu_custom_call.1} parent=11 // pred_fallthru
          _
        // Predicated region
        $region25: #{tpu_custom_call.1} parent=11 // pred_check
          %p220 = pneg %p128
        $region26: #{tpu_custom_call.1} parent=11 // pred_check_branch
          %222 = sbr.rel (%p220) target = $region28
        $region27: #{tpu_custom_call.1} parent=11 // pred_region
          _
        $region28: #{tpu_custom_call.1} parent=11 // pred_fallthru
          _
        // Predicated region
        $region29: #{tpu_custom_call.1} parent=11 // pred_check
          %p223 = pneg %p149
        $region30: #{tpu_custom_call.1} parent=11 // pred_check_branch
          %225 = sbr.rel (%p223) target = $region32
        $region31: #{tpu_custom_call.1} parent=11 // pred_region
          _
        $region32: #{tpu_custom_call.1} parent=11 // pred_fallthru
          _
        // Predicated region
        $region33: #{tpu_custom_call.1} parent=11 // pred_check
          %p226 = pneg %p170
        $region34: #{tpu_custom_call.1} parent=11 // pred_check_branch
          %228 = sbr.rel (%p226) target = $region36
        $region35: #{tpu_custom_call.1} parent=11 // pred_region
          _
        $region36: #{tpu_custom_call.1} parent=11 // pred_fallthru
          _
      $region12: #{tpu_custom_call.1} parent=5 // pred_fallthru
        _
      %p229 = scmp.lt.s32.totalorder %s18, 2
      // Predicated region
      $region37: #{tpu_custom_call.1} parent=5 // pred_check
        %p230 = pneg %p229
      $region38: #{tpu_custom_call.1} parent=5 // pred_check_branch
        %232 = sbr.rel (%p230) target = $region40
      $region39: #{tpu_custom_call.1} parent=5 // pred_region
        // Predicated region
        $region41: #{tpu_custom_call.1} parent=39 // pred_check
          %p233 = pneg %p38
        $region42: #{tpu_custom_call.1} parent=39 // pred_check_branch
          %235 = sbr.rel (%p233) target = $region44
        $region43: #{tpu_custom_call.1} parent=39 // pred_region
          %s236 = sand.u32 %s28, 1
          %s237 = sand.u32 %s28, 1
          %s238 = smul.addr %s237, 32
          %s239 = scalar_lea.vmem [#allocation3], %s238
          %s240 = smul.addr %s18, 8
          %s241 = scalar_lea.vmem %s0, %s240
          // Predicated region
          $region45: #{tpu_custom_call.1} parent=43 // pred_check
            _
          $region46: #{tpu_custom_call.1} parent=43 // pred_check_branch
            %243 = sbr.rel (0) target = $region48
          $region47: #{tpu_custom_call.1} parent=43 // pred_region
            // Predicated region
            $region49: #{tpu_custom_call.1} parent=47 // pred_check
              _
            $region50: #{tpu_custom_call.1} parent=47 // pred_check_branch
              %245 = sbr.rel (0) target = $region52
            $region51: #{tpu_custom_call.1} parent=47 // pred_region
              // Predicated region
              $region64: #{tpu_custom_call.1} parent=51 // pred_check
                _
              $region65: #{tpu_custom_call.1} parent=51 // pred_check_branch
                %267 = sbr.rel (0) target = $region67
              $region66: #{tpu_custom_call.1} parent=51 // pred_region
                loop: start=0, step=1, limit=1
                $region68: #{tpu_custom_call.1} parent=66 // loop_pre_header
                  _
                $region69: #{tpu_custom_call.1} parent=66 // loop_header
                  %s269 = sphi 0, %s273
                  %p270 = scmp.ge.s32.totalorder %s269, 1
                  %s274 = sphi %s241, %s241
                  %s275 = sphi %s239, %s239
                $region70: #{tpu_custom_call.1} parent=66 // loop_header_branch
                  %272 = sbr.rel (%p270) target = $region74
                $region71: #{tpu_custom_call.1} parent=66 // loop_body
                  %v276 = vld [vmem:[%s274] sm:$0xff]
                  %277 = vst [vmem:[%s275] sm:$0xff] %v276
                  %v278 = vld [vmem:[%s274 + $0x10] sm:$0xff]
                  %279 = vst [vmem:[%s275 + $0x8] sm:$0xff] %v278
                  %v280 = vld [vmem:[%s274 + $0x20] sm:$0xff]
                  %281 = vst [vmem:[%s275 + $0x10] sm:$0xff] %v280
                  %v282 = vld [vmem:[%s274 + $0x30] sm:$0xff]
                  %283 = vst [vmem:[%s275 + $0x18] sm:$0xff] %v282
                $region72: #{tpu_custom_call.1} parent=66 // loop_footer
                  %s273 = sadd.s32 1, %s269
                $region73: #{tpu_custom_call.1} parent=66 // loop_footer_branch
                  %268 = sbr.rel target = $region69
                $region74: #{tpu_custom_call.1} parent=66 // loop_exit
                  _
              $region67: #{tpu_custom_call.1} parent=51 // pred_fallthru
                _
              // Predicated region
              $region75: #{tpu_custom_call.1} parent=51 // pred_check
                _
              $region76: #{tpu_custom_call.1} parent=51 // pred_check_branch
                %285 = sbr.rel target = $region78
              $region77: #{tpu_custom_call.1} parent=51 // pred_region
                _
              $region78: #{tpu_custom_call.1} parent=51 // pred_fallthru
                _
            $region52: #{tpu_custom_call.1} parent=47 // pred_fallthru
              _
            // Predicated region
            $region53: #{tpu_custom_call.1} parent=47 // pred_check
              _
            $region54: #{tpu_custom_call.1} parent=47 // pred_check_branch
              %247 = sbr.rel target = $region56
            $region55: #{tpu_custom_call.1} parent=47 // pred_region
              %s249 = ssub.s32 256, 1
              loop: start=0, step=1, limit=1
              $region57: #{tpu_custom_call.1} parent=55 // loop_pre_header
                _
              $region58: #{tpu_custom_call.1} parent=55 // loop_header
                %s251 = sphi 0, %s255
                %p252 = scmp.ge.s32.totalorder %s251, 1
                %s256 = sphi %s241, %s241
                %s257 = sphi %s239, %s239
              $region59: #{tpu_custom_call.1} parent=55 // loop_header_branch
                %254 = sbr.rel (%p252) target = $region63
              $region60: #{tpu_custom_call.1} parent=55 // loop_body
                %v258 = vld [vmem:[%s256] sm:%s249]
                %259 = vst [vmem:[%s257] sm:%s249] %v258
                %v260 = vld [vmem:[%s256 + $0x10] sm:%s249]
                %261 = vst [vmem:[%s257 + $0x8] sm:%s249] %v260
                %v262 = vld [vmem:[%s256 + $0x20] sm:%s249]
                %263 = vst [vmem:[%s257 + $0x10] sm:%s249] %v262
                %v264 = vld [vmem:[%s256 + $0x30] sm:%s249]
                %265 = vst [vmem:[%s257 + $0x18] sm:%s249] %v264
              $region61: #{tpu_custom_call.1} parent=55 // loop_footer
                %s255 = sadd.s32 1, %s251
              $region62: #{tpu_custom_call.1} parent=55 // loop_footer_branch
                %250 = sbr.rel target = $region58
              $region63: #{tpu_custom_call.1} parent=55 // loop_exit
                _
            $region56: #{tpu_custom_call.1} parent=47 // pred_fallthru
              _
          $region48: #{tpu_custom_call.1} parent=43 // pred_fallthru
            _
          %286 = vnop
        $region44: #{tpu_custom_call.1} parent=39 // pred_fallthru
          _
      $region40: #{tpu_custom_call.1} parent=5 // pred_fallthru
        _
      %p287 = scmp.le.s32.totalorder 1, %s18
      %p288 = scmp.lt.s32.totalorder %s18, 3
      %p289 = pnand %p287, %p288
      %p290 = pneg %p289
      // Predicated region
      $region79: #{tpu_custom_call.1} parent=5 // pred_check
        _
      $region80: #{tpu_custom_call.1} parent=5 // pred_check_branch
        %292 = sbr.rel (%p289) target = $region82
      $region81: #{tpu_custom_call.1} parent=5 // pred_region
        %s293 = ssub.s32 %s18, 1
        %s294 = sand.u32 %s31, 1
        %s295 = sand.u32 %s31, 1
        %s296 = smul.addr %s295, 32
        %s297 = scalar_lea.vmem [#allocation3], %s296
        // Predicated region
        $region83: #{tpu_custom_call.1} parent=81 // pred_check
          %p298 = pneg %p44
        $region84: #{tpu_custom_call.1} parent=81 // pred_check_branch
          %300 = sbr.rel (%p298) target = $region86
        $region85: #{tpu_custom_call.1} parent=81 // pred_region
          _
        $region86: #{tpu_custom_call.1} parent=81 // pred_fallthru
          _
        %s301 = sand.u32 %s31, 1
        %s302 = sand.u32 %s31, 1
        %s303 = smul.addr %s302, 32
        %s304 = scalar_lea.vmem [#allocation3], %s303
        %p305 = pneg %p44
        %p306 = pneg %p41
        %p307 = pneg %p65
        %p308 = pneg %p62
        %p309 = pneg %p86
        %p310 = pneg %p83
        %p311 = pneg %p107
        %p312 = pneg %p104
        %p313 = pneg %p128
        %p314 = pneg %p125
        %p315 = pneg %p149
        %p316 = pneg %p146
        %p317 = pneg %p170
        %p318 = pneg %p167
        %p319 = pneg %p196
        %p320 = pneg %p193
        %s321 = sand.u32 %s183, 1
        %s322 = scalar_lea.sflag [#allocation5], %s321
        %s323 = sand.u32 %s183, 1
        %s324 = scalar_lea.vmem [#allocation4], %s323
        %v325 = vld [vmem:[%s297] sm:$0xff]
        %v326 = vld [vmem:[%s297 + $0x8] sm:$0xff]
        %v327 = vld [vmem:[%s297 + $0x10] sm:$0xff]
        %v328 = vld [vmem:[%s297 + $0x18] sm:$0xff]
        %v329 = vld [vmem:[%s1] sm:$0xff]
        %v330 = vld [vmem:[%s1 + $0x8] sm:$0xff]
        %v331 = vld [vmem:[%s1 + $0x10] sm:$0xff]
        %v332 = vld [vmem:[%s1 + $0x18] sm:$0xff]
        %v333 = vld [vmem:[%s1 + $0x20] sm:$0xff]
        %v334 = vld [vmem:[%s1 + $0x28] sm:$0xff]
        %v335 = vld [vmem:[%s1 + $0x30] sm:$0xff]
        %v336 = vld [vmem:[%s1 + $0x38] sm:$0xff]
        %v337 = vld [vmem:[%s4] sm:$0xff]
        %v338 = vld [vmem:[%s4 + $0x8] sm:$0xff]
        %v339 = vld [vmem:[%s4 + $0x10] sm:$0xff]
        %v340 = vld [vmem:[%s4 + $0x18] sm:$0xff]
        %v341 = vld [vmem:[%s4 + $0x20] sm:$0xff]
        %v342 = vld [vmem:[%s4 + $0x28] sm:$0xff]
        %v343 = vld [vmem:[%s4 + $0x30] sm:$0xff]
        %v344 = vld [vmem:[%s4 + $0x38] sm:$0xff]
        %346 = vset.pattern.permute.xlu0 0
        %347 = vperm.xlu0 %346, %v337
        %v348 = vpop.permute.xlu0 %347
        %351 = vset.pattern.permute.xlu0 0
        %352 = vperm.xlu0 %351, %v338
        %v353 = vpop.permute.xlu0 %352
        %356 = vset.pattern.permute.xlu0 0
        %357 = vperm.xlu0 %356, %v339
        %v358 = vpop.permute.xlu0 %357
        %361 = vset.pattern.permute.xlu0 0
        %362 = vperm.xlu0 %361, %v340
        %v363 = vpop.permute.xlu0 %362
        %366 = vset.pattern.permute.xlu0 0
        %367 = vperm.xlu0 %366, %v341
        %v368 = vpop.permute.xlu0 %367
        %371 = vset.pattern.permute.xlu0 0
        %372 = vperm.xlu0 %371, %v342
        %v373 = vpop.permute.xlu0 %372
        %376 = vset.pattern.permute.xlu0 0
        %377 = vperm.xlu0 %376, %v343
        %v378 = vpop.permute.xlu0 %377
        %381 = vset.pattern.permute.xlu0 0
        %382 = vperm.xlu0 %381, %v344
        %v383 = vpop.permute.xlu0 %382
        %vm385 = vcmask 261120
        %v387 = vsel %vm385, %v329, 0
        %v390 = vsel %vm385, %v330, 0
        %v393 = vsel %vm385, %v331, 0
        %v396 = vsel %vm385, %v332, 0
        %v399 = vsel %vm385, %v333, 0
        %v402 = vsel %vm385, %v334, 0
        %v405 = vsel %vm385, %v335, 0
        %v408 = vsel %vm385, %v336, 0
        %410 = vmatpush.msra.mxu0 0.0
        %411 = vmatpush.msra.mxu0 0.0
        %412 = vmatpush.msra.mxu0 0.0
        %413 = vmatpush.msra.mxu0 0.0
        %414 = vmatpush.msra.mxu0 0.0
        %415 = vmatpush.msra.mxu0 0.0
        %416 = vmatpush.msra.mxu0 0.0
        %417 = vmatpush.msra.mxu0 0.0
        %418 = vmatpush.msra.mxu0 0.0
        %419 = vmatpush.msra.mxu0 0.0
        %420 = vmatpush.msra.mxu0 0.0
        %421 = vmatpush.msra.mxu0 0.0
        %422 = vmatpush.msra.mxu0 %v328
        %423 = vmatpush.msra.mxu0 %v327
        %424 = vmatpush.msra.mxu0 %v326
        %425 = vmatpush.msra.mxu0 %v325
        %426 = vmatmul.f32.gmra.mxu0 %v387
        %v427 = vpop.f32.mrf.mxu0
        %v428 = vadd.f32 %v348, %v427
        %429 = vmatmul.f32.gmra.mxu0 %v390
        %v430 = vpop.f32.mrf.mxu0
        %v431 = vadd.f32 %v353, %v430
        %432 = vmatmul.f32.gmra.mxu0 %v393
        %v433 = vpop.f32.mrf.mxu0
        %v434 = vadd.f32 %v358, %v433
        %435 = vmatmul.f32.gmra.mxu0 %v396
        %v436 = vpop.f32.mrf.mxu0
        %v437 = vadd.f32 %v363, %v436
        %438 = vmatmul.f32.gmra.mxu0 %v399
        %v439 = vpop.f32.mrf.mxu0
        %v440 = vadd.f32 %v368, %v439
        %441 = vmatmul.f32.gmra.mxu0 %v402
        %v442 = vpop.f32.mrf.mxu0
        %v443 = vadd.f32 %v373, %v442
        %444 = vmatmul.f32.gmra.mxu0 %v405
        %v445 = vpop.f32.mrf.mxu0
        %v446 = vadd.f32 %v378, %v445
        %447 = vmatmul.f32.gmra.mxu0 %v408
        %v448 = vpop.f32.mrf.mxu0
        %v449 = vadd.f32 %v383, %v448
        %450 = vdwg.mxu0
        %v451 = vmax.f32 %v428, 0.0
        %v452 = vmax.f32 %v431, 0.0
        %v453 = vmax.f32 %v434, 0.0
        %v454 = vmax.f32 %v437, 0.0
        %v455 = vmax.f32 %v440, 0.0
        %v456 = vmax.f32 %v443, 0.0
        %v457 = vmax.f32 %v446, 0.0
        %v458 = vmax.f32 %v449, 0.0
        %v459 = vld [vmem:[%s2] sm:$0xff]
        %v460 = vld [vmem:[%s2 + $0x8] sm:$0xff]
        %v461 = vld [vmem:[%s2 + $0x10] sm:$0xff]
        %v462 = vld [vmem:[%s2 + $0x18] sm:$0xff]
        %v463 = vld [vmem:[%s5] sm:$0xff]
        %v464 = vld [vmem:[%s5 + $0x8] sm:$0xff]
        %v465 = vld [vmem:[%s5 + $0x10] sm:$0xff]
        %v466 = vld [vmem:[%s5 + $0x18] sm:$0xff]
        %468 = vset.pattern.permute.xlu0 0
        %469 = vperm.xlu0 %468, %v463
        %v470 = vpop.permute.xlu0 %469
        %473 = vset.pattern.permute.xlu0 0
        %474 = vperm.xlu0 %473, %v464
        %v475 = vpop.permute.xlu0 %474
        %478 = vset.pattern.permute.xlu0 0
        %479 = vperm.xlu0 %478, %v465
        %v480 = vpop.permute.xlu0 %479
        %483 = vset.pattern.permute.xlu0 0
        %484 = vperm.xlu0 %483, %v466
        %v485 = vpop.permute.xlu0 %484
        %vm487 = vcmask 523264
        %v489 = vsel %vm487, %v459, 0
        %v492 = vsel %vm487, %v460, 0
        %v495 = vsel %vm487, %v461, 0
        %v498 = vsel %vm487, %v462, 0
        %500 = vmatpush.msra.mxu0 0.0
        %501 = vmatpush.msra.mxu0 0.0
        %502 = vmatpush.msra.mxu0 0.0
        %503 = vmatpush.msra.mxu0 0.0
        %504 = vmatpush.msra.mxu0 0.0
        %505 = vmatpush.msra.mxu0 0.0
        %506 = vmatpush.msra.mxu0 0.0
        %507 = vmatpush.msra.mxu0 0.0
        %508 = vmatpush.msra.mxu0 %v458
        %509 = vmatpush.msra.mxu0 %v457
        %510 = vmatpush.msra.mxu0 %v456
        %511 = vmatpush.msra.mxu0 %v455
        %512 = vmatpush.msra.mxu0 %v454
        %513 = vmatpush.msra.mxu0 %v453
        %514 = vmatpush.msra.mxu0 %v452
        %515 = vmatpush.msra.mxu0 %v451
        %516 = vmatmul.f32.gmra.mxu0 %v489
        %v517 = vpop.f32.mrf.mxu0
        %v518 = vadd.f32 %v470, %v517
        %519 = vmatmul.f32.gmra.mxu0 %v492
        %v520 = vpop.f32.mrf.mxu0
        %v521 = vadd.f32 %v475, %v520
        %522 = vmatmul.f32.gmra.mxu0 %v495
        %v523 = vpop.f32.mrf.mxu0
        %v524 = vadd.f32 %v480, %v523
        %525 = vmatmul.f32.gmra.mxu0 %v498
        %v526 = vpop.f32.mrf.mxu0
        %v527 = vadd.f32 %v485, %v526
        %528 = vdwg.mxu0
        %v529 = vtanh.pop %v518
        %v530 = vtanh.pop %v521
        %v531 = vtanh.pop %v524
        %v532 = vtanh.pop %v527
        %v533 = vld [vmem:[%s3] sm:$0x1]
        %v534 = vld [vmem:[#allocation2] sm:$0x1]
        %536 = vset.pattern.permute.xlu0 0
        %537 = vperm.xlu0 %536, %v534
        %v538 = vpop.permute.xlu0 %537
        %v540 = vperm.slane %v538, 0
        %v542 = vsel %vm385, %v533, 0
        %544 = vmatpush.msra.mxu0 0.0
        %545 = vmatpush.msra.mxu0 0.0
        %546 = vmatpush.msra.mxu0 0.0
        %547 = vmatpush.msra.mxu0 0.0
        %548 = vmatpush.msra.mxu0 0.0
        %549 = vmatpush.msra.mxu0 0.0
        %550 = vmatpush.msra.mxu0 0.0
        %551 = vmatpush.msra.mxu0 0.0
        %552 = vmatpush.msra.mxu0 0.0
        %553 = vmatpush.msra.mxu0 0.0
        %554 = vmatpush.msra.mxu0 0.0
        %555 = vmatpush.msra.mxu0 0.0
        %556 = vmatpush.msra.mxu0 %v532
        %557 = vmatpush.msra.mxu0 %v531
        %558 = vmatpush.msra.mxu0 %v530
        %559 = vmatpush.msra.mxu0 %v529
        %560 = vmatmul.f32.gmra.mxu0 %v542
        %v561 = vpop.f32.mrf.mxu0
        %v562 = vadd.f32 %v540, %v561
        %563 = vdwg.mxu0
        %v564 = vsub.f32 0.0, %v562
        %v565 = vmul.f32 %v564, 1.442695
        %v566 = vpow.pop %v565
        %v567 = vadd.f32 %v566, 1.0
        %v568 = vrcp.pop %v567
        %v569 = vmul.f32 %v567, %v568
        %v570 = vsub.f32 1.0, %v569
        %v571 = vmul.f32 %v568, %v570
        %v572 = vadd.f32 %v568, %v571
        %vm573 = vweird.f32 %v567
        %vm574 = vweird.f32 %v568
        %vm575 = vmor %vm573, %vm574
        %v576 = vsel %vm575, %v568, %v572
        %v577 = vand.u32 2147483647, %v567
        %vm578 = vcmp.eq.f32.partialorder %v577, 8.507059e+37
        %v579 = vand.u32 %v567, 2147483648
        %v580 = vor.u32 1.1754944e-38, %v579
        %v581 = vsel %vm578, %v580, %v576
        %v582 = vmul.f32 1.0, %v581
        %583 = vst [vmem:[%s324] sm:$0x1] %v582
        %s584 = sand.u32 %s183, 1
        %s585 = scalar_lea.sflag [#allocation5], %s584
        %s586 = sand.u32 %s183, 1
        %s587 = scalar_lea.vmem [#allocation4], %s586
        // Predicated region
        $region87: #{tpu_custom_call.1} parent=81 // pred_check
          %p588 = pneg %p193
        $region88: #{tpu_custom_call.1} parent=81 // pred_check_branch
          %590 = sbr.rel (%p588) target = $region90
        $region89: #{tpu_custom_call.1} parent=81 // pred_region
          %592 = vsyncadd %s585, 0
          %s593 = scalar_lea.hbm %s7, %s23
          %s595 = sshll.u32 %s587, 4
          %s596 = int_to_ptr.vmem [resolvable:$true] %s595
          %s597 = sshll.u32 %s593, 4
          %s598 = int_to_ptr.hbm [resolvable:$true] %s597
          %600 = dma.vmem_to_hbm [thread:$0]  %s596, 16, %s598, %s585
        $region90: #{tpu_custom_call.1} parent=81 // pred_fallthru
          _
      $region82: #{tpu_custom_call.1} parent=5 // pred_fallthru
        _
      %p601 = scmp.le.s32.totalorder 2, %s18
      // Predicated region
      $region91: #{tpu_custom_call.1} parent=5 // pred_check
        %p602 = pneg %p601
      $region92: #{tpu_custom_call.1} parent=5 // pred_check_branch
        %604 = sbr.rel (%p602) target = $region94
      $region93: #{tpu_custom_call.1} parent=5 // pred_region
        %s605 = ssub.s32 %s18, 2
        // Predicated region
        $region95: #{tpu_custom_call.1} parent=93 // pred_check
          %p606 = pneg %p199
        $region96: #{tpu_custom_call.1} parent=93 // pred_check_branch
          %608 = sbr.rel (%p606) target = $region98
        $region97: #{tpu_custom_call.1} parent=93 // pred_region
          %s609 = sand.u32 %s184, 1
          %s610 = scalar_lea.sflag [#allocation5], %s609
          %s611 = sand.u32 %s184, 1
          %s612 = scalar_lea.vmem [#allocation4], %s611
          %614 = dma.done %s610, 16
        $region98: #{tpu_custom_call.1} parent=93 // pred_fallthru
          _
      $region94: #{tpu_custom_call.1} parent=5 // pred_fallthru
        _
    $region6: #{tpu_custom_call.1} parent=1 // loop_footer
      %s22 = sadd.s32 1, %s18
    $region7: #{tpu_custom_call.1} parent=1 // loop_footer_branch
      %17 = sbr.rel target = $region3
    $region8: #{tpu_custom_call.1} parent=1 // loop_exit
      _
    %615 = vsyncpa [#allocation5], 1
    %s616 = scalar_lea.sflag [#allocation5], 1
    %617 = vsyncpa %s616, 1

</llo_original>
